<compile_context>
chip_gen: v7x
topology: tpu7x:2x2x1
jax: 0.10.0
libtpu: 0.0.40
codegen_flags: <defaults>
</compile_context>

<pallas_src>
import jax
import jax.numpy as jnp
from jax import lax
from jax.experimental import pallas as pl
from jax.experimental.pallas import tpu as pltpu


def attribute_fc_kernel(x_ref, w1t_ref, b1_ref, w2t_ref, b2_ref, w3t_ref, b3_ref,
                        o_ref):
    """Fused MLP (Linear->ReLU->Linear->ReLU->Linear) + softmax, feature-major.

    x_ref:   (bm, in_dim)  f32   (batch rows of the input tile)
    w*t_ref: (out_feat, in_feat) bf16   (pre-transposed weights)
    b*_ref:  (out_feat, 1) f32
    o_ref:   (out_dim, bm) f32/bf16  -- batch on lanes (lane-dense output block)
    """
    # In-kernel cast: x is read from HBM once in f32, converted to bf16 for the MXU.
    x = x_ref[...].astype(jnp.bfloat16)                       # (bm, in_dim)

    # h1 = W1^T @ x^T : contract the in_dim axes ("nt" matmul, MXU-native).
    h1 = lax.dot_general(w1t_ref[...], x, (((1,), (1,)), ((), ())),
                         preferred_element_type=jnp.float32)  # (hidden, bm)
    h1 = jnp.maximum(h1 + b1_ref[...], 0.0).astype(jnp.bfloat16)

    h2 = jnp.dot(w2t_ref[...], h1,
                 preferred_element_type=jnp.float32)          # (fc_dim, bm)
    h2 = jnp.maximum(h2 + b2_ref[...], 0.0).astype(jnp.bfloat16)

    # Newly appended Linear(fc_dim, output_shape).
    logits = jnp.dot(w3t_ref[...], h2,
                     preferred_element_type=jnp.float32) + b3_ref[...]  # (out_dim, bm)

    # F.softmax over the class axis (axis 0 in this feature-major layout), in f32.
    m = jnp.max(logits, axis=0, keepdims=True)
    e = jnp.exp(logits - m)
    s = jnp.sum(e, axis=0, keepdims=True)
    # approx=False: exact normalization (rows sum to 1); the EUP is idle either way.
    o_ref[...] = (e * pl.reciprocal(s, approx=False)).astype(o_ref.dtype)


def prepare_params(w1, b1, w2, b2, w3, b3):
    """One-time (model-init) parameter prep: transpose + bf16 weights, (.,1) f32 biases."""
    to_w = lambda w: jnp.asarray(w, jnp.bfloat16).T            # (out_feat, in_feat)
    to_b = lambda b: jnp.asarray(b, jnp.float32).reshape(-1, 1)  # (out_feat, 1)
    return (to_w(w1), to_b(b1), to_w(w2), to_b(b2), to_w(w3), to_b(b3))


def _pick_bm(B, target=8192):
    """Large lane-aligned batch tile (amortizes ~0.35us/step grid overhead) while
    minimizing padding.  Single step for small batches (v5e/v6e); for v7x pass an
    explicit bm that yields an even number of grid steps >= 2."""
    n_steps = max(1, -(-B // target))          # ceil(B / target)
    bm = -(-B // n_steps)                      # ceil(B / n_steps)
    return ((bm + 127) // 128) * 128           # lane-align (batch sits on lanes)


def attribute_fc(x, params, *, bm=None, out_dtype=jnp.float32):
    """AttributeFC forward: softmax(Linear(ReLU(Linear(ReLU(Linear(x)))))).

    x: (B, in_dim) float32.  params from prepare_params().  Returns (B, out_dim).
    """
    w1t, b1, w2t, b2, w3t, b3 = params
    B, in_dim = x.shape
    hidden = w1t.shape[0]
    fc_dim = w2t.shape[0]
    out_dim = w3t.shape[0]

    if bm is None:
        bm = _pick_bm(B)

    # Pad the batch only when it does not already tile evenly (no pad for the common
    # lane-aligned case); padded rows produce finite softmax rows and are sliced off.
    B_pad = ((B + bm - 1) // bm) * bm
    xp = x if B_pad == B else jnp.pad(x, ((0, B_pad - B), (0, 0)))

    grid = (B_pad // bm,)
    resident = lambda shape: pl.BlockSpec(shape, lambda i: (0, 0))  # weights stay in VMEM

    out_fm = pl.pallas_call(
        attribute_fc_kernel,
        out_shape=jax.ShapeDtypeStruct((out_dim, B_pad), out_dtype),
        grid_spec=pltpu.PrefetchScalarGridSpec(
            num_scalar_prefetch=0,
            grid=grid,
            in_specs=[
                pl.BlockSpec((bm, in_dim), lambda i: (i, 0)),   # x tile (f32, cast in kernel)
                resident((hidden, in_dim)),                      # W1^T
                resident((hidden, 1)),                           # b1
                resident((fc_dim, hidden)),                      # W2^T
                resident((fc_dim, 1)),                           # b2
                resident((out_dim, fc_dim)),                     # W3^T
                resident((out_dim, 1)),                          # b3
            ],
            out_specs=pl.BlockSpec((out_dim, bm), lambda i: (0, i)),  # lane-dense block
        ),
        compiler_params=pltpu.CompilerParams(
            dimension_semantics=("parallel",),
            vmem_limit_bytes=32 << 20),
    )(xp, w1t, b1, w2t, b2, w3t, b3)

    # Back to the module's (batch, classes) layout.  This is the only extra pass over
    # the (small) output; everything inside the kernel is lane-dense.
    out = out_fm.T
    return out[:B] if B_pad != B else out


def _reference(x, w1, b1, w2, b2, w3, b3):
    h1 = jnp.maximum(x @ w1 + b1, 0.0)
    h2 = jnp.maximum(h1 @ w2 + b2, 0.0)
    logits = h2 @ w3 + b3
    return jax.nn.softmax(logits, axis=-1)


if __name__ == "__main__":
    # Small, deterministic shapes consistent with the module.
    batch = 256
    in_dim = 32        # input features to the pretrained FC head
    hidden = 64        # hidden width of the pretrained head
    fc_dim = 48        # "Number of outputs of the pre-trained model's FC layers"
    output_shape = 16  # desired number of attribute outputs

    key = jax.random.PRNGKey(0)
    kx, k1, k2, k3, kb1, kb2, kb3 = jax.random.split(key, 7)

    x = jax.random.normal(kx, (batch, in_dim), dtype=jnp.float32)

    # Deterministic synthetic parameters in PyTorch nn.Linear layout (kaiming-ish).
    w1 = jax.random.normal(k1, (in_dim, hidden), dtype=jnp.float32) * (1.0 / jnp.sqrt(in_dim))
    b1 = jax.random.normal(kb1, (hidden,), dtype=jnp.float32) * 0.01
    w2 = jax.random.normal(k2, (hidden, fc_dim), dtype=jnp.float32) * (1.0 / jnp.sqrt(hidden))
    b2 = jax.random.normal(kb2, (fc_dim,), dtype=jnp.float32) * 0.01
    w3 = jax.random.normal(k3, (fc_dim, output_shape), dtype=jnp.float32) * (1.0 / jnp.sqrt(fc_dim))
    b3 = jax.random.normal(kb3, (output_shape,), dtype=jnp.float32) * 0.01

    params = prepare_params(w1, b1, w2, b2, w3, b3)   # one-time init-side prep

    out = attribute_fc(x, params)
    out = jax.block_until_ready(out)

    # Sanity: shape, softmax rows sum to ~1 (exact normalization in f32), and matches
    # the f32 reference within bf16-matmul tolerance.
    ref = _reference(x, w1, b1.reshape(1, -1), w2, b2.reshape(1, -1), w3, b3.reshape(1, -1))
    row_sums = jnp.sum(out, axis=-1)
    assert out.shape == (batch, output_shape)
    assert bool(jnp.allclose(row_sums, 1.0, atol=2e-3))
    assert bool(jnp.allclose(out, ref, atol=5e-2))

    print("KERNEL_OK")
</pallas_src>

<mosaic_0001>
module attributes {stable_mosaic.version = 11 : i64} {
  func.func @attribute_fc_kernel(%arg0: i32, %arg1: memref<256x32xf32, #tpu.memory_space<vmem>>, %arg2: memref<64x32xbf16, #tpu.memory_space<vmem>>, %arg3: memref<64x1xf32, #tpu.memory_space<vmem>>, %arg4: memref<48x64xbf16, #tpu.memory_space<vmem>>, %arg5: memref<48x1xf32, #tpu.memory_space<vmem>>, %arg6: memref<16x48xbf16, #tpu.memory_space<vmem>>, %arg7: memref<16x1xf32, #tpu.memory_space<vmem>>, %arg8: memref<16x256xf32, #tpu.memory_space<vmem>>) attributes {dimension_semantics = [#tpu.dimension_semantics<parallel>], iteration_bounds = array<i64: 1>, scalar_prefetch = 0 : i64, scratch_operands = 0 : i64, tpu.core_type = #tpu.core_type<tc>, window_params = [{transform_indices = @transform_0, window_bounds = array<i64: 256, 32>}, {pipeline_mode = #tpu.pipeline_mode<synchronous>, transform_indices = @transform_1, window_bounds = array<i64: 64, 32>}, {pipeline_mode = #tpu.pipeline_mode<synchronous>, transform_indices = @transform_2, window_bounds = array<i64: 64, 1>}, {pipeline_mode = #tpu.pipeline_mode<synchronous>, transform_indices = @transform_3, window_bounds = array<i64: 48, 64>}, {pipeline_mode = #tpu.pipeline_mode<synchronous>, transform_indices = @transform_4, window_bounds = array<i64: 48, 1>}, {pipeline_mode = #tpu.pipeline_mode<synchronous>, transform_indices = @transform_5, window_bounds = array<i64: 16, 48>}, {pipeline_mode = #tpu.pipeline_mode<synchronous>, transform_indices = @transform_6, window_bounds = array<i64: 16, 1>}, {transform_indices = @transform_7, window_bounds = array<i64: 16, 256>}]} {
    %c0 = arith.constant 0 : index
    %c0_0 = arith.constant 0 : index
    %0 = vector.load %arg1[%c0, %c0_0] : memref<256x32xf32, #tpu.memory_space<vmem>>, vector<256x32xf32>
    %1 = arith.truncf %0 : vector<256x32xf32> to vector<256x32xbf16>
    %c0_1 = arith.constant 0 : index
    %c0_2 = arith.constant 0 : index
    %2 = vector.load %arg2[%c0_1, %c0_2] : memref<64x32xbf16, #tpu.memory_space<vmem>>, vector<64x32xbf16>
    %cst = arith.constant dense<0.000000e+00> : vector<64x256xf32>
    %3 = tpu.matmul %2, %1, %cst {dimension_numbers = #tpu.dot_dimension_numbers<[1], [1], [0], [0], [0, 0, 1, 0], [], []>} : vector<64x32xbf16>, vector<256x32xbf16>, vector<64x256xf32> -> vector<64x256xf32>
    %c0_3 = arith.constant 0 : index
    %c0_4 = arith.constant 0 : index
    %4 = vector.load %arg3[%c0_3, %c0_4] : memref<64x1xf32, #tpu.memory_space<vmem>>, vector<64x1xf32>
    %5 = vector.broadcast %4 : vector<64x1xf32> to vector<64x256xf32>
    %6 = arith.addf %3, %5 : vector<64x256xf32>
    %cst_5 = arith.constant 0.000000e+00 : f32
    %7 = vector.broadcast %cst_5 : f32 to vector<64x256xf32>
    %8 = arith.maximumf %6, %7 : vector<64x256xf32>
    %9 = arith.truncf %8 : vector<64x256xf32> to vector<64x256xbf16>
    %c0_6 = arith.constant 0 : index
    %c0_7 = arith.constant 0 : index
    %10 = vector.load %arg4[%c0_6, %c0_7] : memref<48x64xbf16, #tpu.memory_space<vmem>>, vector<48x64xbf16>
    %cst_8 = arith.constant dense<0.000000e+00> : vector<48x256xf32>
    %11 = tpu.matmul %10, %9, %cst_8 {dimension_numbers = #tpu.dot_dimension_numbers<[1], [0], [0], [1], [0, 0, 1, 1], [], []>} : vector<48x64xbf16>, vector<64x256xbf16>, vector<48x256xf32> -> vector<48x256xf32>
    %c0_9 = arith.constant 0 : index
    %c0_10 = arith.constant 0 : index
    %12 = vector.load %arg5[%c0_9, %c0_10] : memref<48x1xf32, #tpu.memory_space<vmem>>, vector<48x1xf32>
    %13 = vector.broadcast %12 : vector<48x1xf32> to vector<48x256xf32>
    %14 = arith.addf %11, %13 : vector<48x256xf32>
    %cst_11 = arith.constant 0.000000e+00 : f32
    %15 = vector.broadcast %cst_11 : f32 to vector<48x256xf32>
    %16 = arith.maximumf %14, %15 : vector<48x256xf32>
    %17 = arith.truncf %16 : vector<48x256xf32> to vector<48x256xbf16>
    %c0_12 = arith.constant 0 : index
    %c0_13 = arith.constant 0 : index
    %18 = vector.load %arg6[%c0_12, %c0_13] : memref<16x48xbf16, #tpu.memory_space<vmem>>, vector<16x48xbf16>
    %cst_14 = arith.constant dense<0.000000e+00> : vector<16x256xf32>
    %19 = tpu.matmul %18, %17, %cst_14 {dimension_numbers = #tpu.dot_dimension_numbers<[1], [0], [0], [1], [0, 0, 1, 1], [], []>} : vector<16x48xbf16>, vector<48x256xbf16>, vector<16x256xf32> -> vector<16x256xf32>
    %c0_15 = arith.constant 0 : index
    %c0_16 = arith.constant 0 : index
    %20 = vector.load %arg7[%c0_15, %c0_16] : memref<16x1xf32, #tpu.memory_space<vmem>>, vector<16x1xf32>
    %21 = vector.broadcast %20 : vector<16x1xf32> to vector<16x256xf32>
    %22 = arith.addf %19, %21 : vector<16x256xf32>
    %cst_17 = arith.constant dense<0xFF800000> : vector<256xf32>
    %23 = vector.multi_reduction <maximumf>, %22, %cst_17 [0] : vector<16x256xf32> to vector<256xf32>
    %24 = vector.shape_cast %23 : vector<256xf32> to vector<1x256xf32>
    %25 = vector.broadcast %24 : vector<1x256xf32> to vector<16x256xf32>
    %26 = arith.subf %22, %25 : vector<16x256xf32>
    %27 = math.exp %26 : vector<16x256xf32>
    %cst_18 = arith.constant dense<0.000000e+00> : vector<256xf32>
    %28 = vector.multi_reduction <add>, %27, %cst_18 [0] : vector<16x256xf32> to vector<256xf32>
    %29 = vector.shape_cast %28 : vector<256xf32> to vector<1x256xf32>
    %30 = tpu.reciprocal %29 : vector<1x256xf32> -> vector<1x256xf32>
    %31 = vector.broadcast %30 : vector<1x256xf32> to vector<16x256xf32>
    %32 = arith.mulf %27, %31 : vector<16x256xf32>
    %c0_19 = arith.constant 0 : index
    %c0_20 = arith.constant 0 : index
    %33 = vector.load %arg8[%c0_19, %c0_20] : memref<16x256xf32, #tpu.memory_space<vmem>>, vector<16x256xf32>
    tpu.vector_store %arg8[%c0_19, %c0_20], %32 {strides = array<i32>} : memref<16x256xf32, #tpu.memory_space<vmem>>, vector<16x256xf32>,
    return
  }
  func.func @transform_0(%arg0: i32) -> (i32, i32) {
    %c0_i32 = arith.constant 0 : i32
    %c0_i32_0 = arith.constant 0 : i32
    return %arg0, %c0_i32 : i32, i32
  }
  func.func @transform_1(%arg0: i32) -> (i32, i32) {
    %c0_i32 = arith.constant 0 : i32
    %c0_i32_0 = arith.constant 0 : i32
    %c0_i32_1 = arith.constant 0 : i32
    return %c0_i32, %c0_i32_0 : i32, i32
  }
  func.func @transform_2(%arg0: i32) -> (i32, i32) {
    %c0_i32 = arith.constant 0 : i32
    %c0_i32_0 = arith.constant 0 : i32
    %c0_i32_1 = arith.constant 0 : i32
    return %c0_i32, %c0_i32_0 : i32, i32
  }
  func.func @transform_3(%arg0: i32) -> (i32, i32) {
    %c0_i32 = arith.constant 0 : i32
    %c0_i32_0 = arith.constant 0 : i32
    %c0_i32_1 = arith.constant 0 : i32
    return %c0_i32, %c0_i32_0 : i32, i32
  }
  func.func @transform_4(%arg0: i32) -> (i32, i32) {
    %c0_i32 = arith.constant 0 : i32
    %c0_i32_0 = arith.constant 0 : i32
    %c0_i32_1 = arith.constant 0 : i32
    return %c0_i32, %c0_i32_0 : i32, i32
  }
  func.func @transform_5(%arg0: i32) -> (i32, i32) {
    %c0_i32 = arith.constant 0 : i32
    %c0_i32_0 = arith.constant 0 : i32
    %c0_i32_1 = arith.constant 0 : i32
    return %c0_i32, %c0_i32_0 : i32, i32
  }
  func.func @transform_6(%arg0: i32) -> (i32, i32) {
    %c0_i32 = arith.constant 0 : i32
    %c0_i32_0 = arith.constant 0 : i32
    %c0_i32_1 = arith.constant 0 : i32
    return %c0_i32, %c0_i32_0 : i32, i32
  }
  func.func @transform_7(%arg0: i32) -> (i32, i32) {
    %c0_i32 = arith.constant 0 : i32
    %c0_i32_0 = arith.constant 0 : i32
    return %c0_i32, %arg0 : i32, i32
  }
}

</mosaic_0001>

<llo_original>
// kernel: tpu_custom_call.1
$region0: #{tpu_custom_call.1}
  #allocation0 [shape = 'u32[]', space=smem, size = 0x4, offset = 0x4, fixed_abs, tag = 'smem constant byte address 0x4 - core index']
  #allocation1 [shape = 'u32[144,128]{1,0:T(1,128)}', space=vmem, size = 0x12000, scoped, tag = 'internal scratch']
  %s0 = inlined_call_operand.vmem [shape: f32[256,32], index: 0, kind: input, shape index: {}]
  %s1 = inlined_call_operand.vmem [shape: bf16[64,32], index: 1, kind: input, shape index: {}]
  %s2 = inlined_call_operand.vmem [shape: f32[64,1], index: 2, kind: input, shape index: {}]
  %s3 = inlined_call_operand.vmem [shape: bf16[48,64], index: 3, kind: input, shape index: {}]
  %s4 = inlined_call_operand.vmem [shape: f32[48,1], index: 4, kind: input, shape index: {}]
  %s5 = inlined_call_operand.vmem [shape: bf16[16,48], index: 5, kind: input, shape index: {}]
  %s6 = inlined_call_operand.vmem [shape: f32[16,1], index: 6, kind: input, shape index: {}]
  %s7 = inlined_call_operand.hbm [shape: f32[16,256], index: 7, kind: output, shape index: {}]
  %s8 = sld [smem:[#allocation0]]
  $region38: #{tpu_custom_call.1} parent=0
    _
  %s10 = ssub.s32 1, %s8
  %s11 = scalar_select 0, %s10, %s8
  $region1: #{tpu_custom_call.1} parent=0
    #allocation2 [shape = 'u8[16384]{0}', space=vmem, size = 0x4000, scoped, tag = 'output window, operand 0, single buffered']
    #allocation3 [shape = 's32[1]{0}', space=sflag, size = 0x4, scoped, tag = 'scoped memory for tpu_custom_call.1']
    %12 = vsyncpa [#allocation3], 0
    // Predicated region
    $region2: #{tpu_custom_call.1} parent=1 // pred_check
      _
    $region3: #{tpu_custom_call.1} parent=1 // pred_check_branch
      %14 = sbr.rel (0) target = $region5
    $region4: #{tpu_custom_call.1} parent=1 // pred_region
      _
    $region5: #{tpu_custom_call.1} parent=1 // pred_fallthru
      _
    // Predicated region
    $region6: #{tpu_custom_call.1} parent=1 // pred_check
      _
    $region7: #{tpu_custom_call.1} parent=1 // pred_check_branch
      %16 = sbr.rel (0) target = $region9
    $region8: #{tpu_custom_call.1} parent=1 // pred_region
      _
    $region9: #{tpu_custom_call.1} parent=1 // pred_fallthru
      _
    // Predicated region
    $region10: #{tpu_custom_call.1} parent=1 // pred_check
      _
    $region11: #{tpu_custom_call.1} parent=1 // pred_check_branch
      %18 = sbr.rel (0) target = $region13
    $region12: #{tpu_custom_call.1} parent=1 // pred_region
      _
    $region13: #{tpu_custom_call.1} parent=1 // pred_fallthru
      _
    // Predicated region
    $region14: #{tpu_custom_call.1} parent=1 // pred_check
      _
    $region15: #{tpu_custom_call.1} parent=1 // pred_check_branch
      %20 = sbr.rel (0) target = $region17
    $region16: #{tpu_custom_call.1} parent=1 // pred_region
      _
    $region17: #{tpu_custom_call.1} parent=1 // pred_fallthru
      _
    // Predicated region
    $region18: #{tpu_custom_call.1} parent=1 // pred_check
      _
    $region19: #{tpu_custom_call.1} parent=1 // pred_check_branch
      %22 = sbr.rel (0) target = $region21
    $region20: #{tpu_custom_call.1} parent=1 // pred_region
      _
    $region21: #{tpu_custom_call.1} parent=1 // pred_fallthru
      _
    // Predicated region
    $region22: #{tpu_custom_call.1} parent=1 // pred_check
      _
    $region23: #{tpu_custom_call.1} parent=1 // pred_check_branch
      %24 = sbr.rel (0) target = $region25
    $region24: #{tpu_custom_call.1} parent=1 // pred_region
      _
    $region25: #{tpu_custom_call.1} parent=1 // pred_fallthru
      _
    // Predicated region
    $region26: #{tpu_custom_call.1} parent=1 // pred_check
      _
    $region27: #{tpu_custom_call.1} parent=1 // pred_check_branch
      %26 = sbr.rel (0) target = $region29
    $region28: #{tpu_custom_call.1} parent=1 // pred_region
      _
    $region29: #{tpu_custom_call.1} parent=1 // pred_fallthru
      _
    %v28 = vld [vmem:[%s0] sm:$0xff]
    %v29 = vld [vmem:[%s0 + $0x8] sm:$0xff]
    %v30 = vld [vmem:[%s0 + $0x10] sm:$0xff]
    %v31 = vld [vmem:[%s0 + $0x18] sm:$0xff]
    %v32 = vld [vmem:[%s0 + $0x20] sm:$0xff]
    %v33 = vld [vmem:[%s0 + $0x28] sm:$0xff]
    %v34 = vld [vmem:[%s0 + $0x30] sm:$0xff]
    %v35 = vld [vmem:[%s0 + $0x38] sm:$0xff]
    %v36 = vld [vmem:[%s0 + $0x40] sm:$0xff]
    %v37 = vld [vmem:[%s0 + $0x48] sm:$0xff]
    %v38 = vld [vmem:[%s0 + $0x50] sm:$0xff]
    %v39 = vld [vmem:[%s0 + $0x58] sm:$0xff]
    %v40 = vld [vmem:[%s0 + $0x60] sm:$0xff]
    %v41 = vld [vmem:[%s0 + $0x68] sm:$0xff]
    %v42 = vld [vmem:[%s0 + $0x70] sm:$0xff]
    %v43 = vld [vmem:[%s0 + $0x78] sm:$0xff]
    %v44 = vld [vmem:[%s0 + $0x80] sm:$0xff]
    %v45 = vld [vmem:[%s0 + $0x88] sm:$0xff]
    %v46 = vld [vmem:[%s0 + $0x90] sm:$0xff]
    %v47 = vld [vmem:[%s0 + $0x98] sm:$0xff]
    %v48 = vld [vmem:[%s0 + $0xa0] sm:$0xff]
    %v49 = vld [vmem:[%s0 + $0xa8] sm:$0xff]
    %v50 = vld [vmem:[%s0 + $0xb0] sm:$0xff]
    %v51 = vld [vmem:[%s0 + $0xb8] sm:$0xff]
    %v52 = vld [vmem:[%s0 + $0xc0] sm:$0xff]
    %v53 = vld [vmem:[%s0 + $0xc8] sm:$0xff]
    %v54 = vld [vmem:[%s0 + $0xd0] sm:$0xff]
    %v55 = vld [vmem:[%s0 + $0xd8] sm:$0xff]
    %v56 = vld [vmem:[%s0 + $0xe0] sm:$0xff]
    %v57 = vld [vmem:[%s0 + $0xe8] sm:$0xff]
    %v58 = vld [vmem:[%s0 + $0xf0] sm:$0xff]
    %v59 = vld [vmem:[%s0 + $0xf8] sm:$0xff]
    %v60 = vpack.c.bf16 %v29, %v28
    %v61 = vpack.c.bf16 %v31, %v30
    %v62 = vpack.c.bf16 %v33, %v32
    %v63 = vpack.c.bf16 %v35, %v34
    %v64 = vpack.c.bf16 %v37, %v36
    %v65 = vpack.c.bf16 %v39, %v38
    %v66 = vpack.c.bf16 %v41, %v40
    %v67 = vpack.c.bf16 %v43, %v42
    %v68 = vpack.c.bf16 %v45, %v44
    %v69 = vpack.c.bf16 %v47, %v46
    %v70 = vpack.c.bf16 %v49, %v48
    %v71 = vpack.c.bf16 %v51, %v50
    %v72 = vpack.c.bf16 %v53, %v52
    %v73 = vpack.c.bf16 %v55, %v54
    %v74 = vpack.c.bf16 %v57, %v56
    %v75 = vpack.c.bf16 %v59, %v58
    %v76 = vld [vmem:[%s1] sm:$0xf]
    %v77 = vld [vmem:[%s1 + $0x4] sm:$0xf]
    %v78 = vld [vmem:[%s1 + $0x8] sm:$0xf]
    %v79 = vld [vmem:[%s1 + $0xc] sm:$0xf]
    %v80 = vld [vmem:[%s1 + $0x10] sm:$0xf]
    %v81 = vld [vmem:[%s1 + $0x14] sm:$0xf]
    %v82 = vld [vmem:[%s1 + $0x18] sm:$0xf]
    %v83 = vld [vmem:[%s1 + $0x1c] sm:$0xf]
    %v84 = vld [vmem:[%s2] sm:$0xff]
    %v85 = vld [vmem:[%s2 + $0x8] sm:$0xff]
    %v86 = vld [vmem:[%s2 + $0x10] sm:$0xff]
    %v87 = vld [vmem:[%s2 + $0x18] sm:$0xff]
    %v88 = vld [vmem:[%s2 + $0x20] sm:$0xff]
    %v89 = vld [vmem:[%s2 + $0x28] sm:$0xff]
    %v90 = vld [vmem:[%s2 + $0x30] sm:$0xff]
    %v91 = vld [vmem:[%s2 + $0x38] sm:$0xff]
    %93 = vset.pattern.permute.xlu0 0
    %94 = vperm.xlu0 %93, %v84
    %v95 = vpop.permute.xlu0 %94
    %98 = vset.pattern.permute.xlu0 0
    %99 = vperm.xlu0 %98, %v85
    %v100 = vpop.permute.xlu0 %99
    %103 = vset.pattern.permute.xlu0 0
    %104 = vperm.xlu0 %103, %v86
    %v105 = vpop.permute.xlu0 %104
    %108 = vset.pattern.permute.xlu0 0
    %109 = vperm.xlu0 %108, %v87
    %v110 = vpop.permute.xlu0 %109
    %113 = vset.pattern.permute.xlu0 0
    %114 = vperm.xlu0 %113, %v88
    %v115 = vpop.permute.xlu0 %114
    %118 = vset.pattern.permute.xlu0 0
    %119 = vperm.xlu0 %118, %v89
    %v120 = vpop.permute.xlu0 %119
    %123 = vset.pattern.permute.xlu0 0
    %124 = vperm.xlu0 %123, %v90
    %v125 = vpop.permute.xlu0 %124
    %128 = vset.pattern.permute.xlu0 0
    %129 = vperm.xlu0 %128, %v91
    %v130 = vpop.permute.xlu0 %129
    %v140 = vunpack.c.l.b16 %v76
    %v141 = vunpack.c.l.b16 %v77
    %v142 = vunpack.c.l.b16 %v78
    %v143 = vunpack.c.l.b16 %v79
    %v144 = vunpack.c.l.b16 %v80
    %v145 = vunpack.c.l.b16 %v81
    %v146 = vunpack.c.l.b16 %v82
    %v147 = vunpack.c.l.b16 %v83
    %v148 = vpack.c.b16 %v141, %v140
    %v149 = vpack.c.b16 %v143, %v142
    %v150 = vpack.c.b16 %v145, %v144
    %v151 = vpack.c.b16 %v147, %v146
    %vm152 = vcmask 261120
    %v154 = vsel %vm152, %v148, 0
    %v157 = vsel %vm152, %v149, 0
    %v160 = vsel %vm152, %v150, 0
    %v163 = vsel %vm152, %v151, 0
    %v166 = vsel %vm152, %v60, 0
    %v169 = vsel %vm152, %v61, 0
    %v172 = vsel %vm152, %v62, 0
    %v175 = vsel %vm152, %v63, 0
    %v178 = vsel %vm152, %v64, 0
    %v181 = vsel %vm152, %v65, 0
    %v184 = vsel %vm152, %v66, 0
    %v187 = vsel %vm152, %v67, 0
    %v190 = vsel %vm152, %v68, 0
    %v193 = vsel %vm152, %v69, 0
    %v196 = vsel %vm152, %v70, 0
    %v199 = vsel %vm152, %v71, 0
    %v202 = vsel %vm152, %v72, 0
    %v205 = vsel %vm152, %v73, 0
    %v208 = vsel %vm152, %v74, 0
    %v211 = vsel %vm152, %v75, 0
    %213 = vmatprep.subr.bf16.mxu0 0
    %214 = vmatpush1.bf16.xpose.msra.mxu0 %v166
    %215 = vmatprep.subr.bf16.mxu0 0
    %216 = vmatpush1.bf16.xpose.msra.mxu0 %v169
    %217 = vmatprep.subr.bf16.mxu0 0
    %218 = vmatpush1.bf16.xpose.msra.mxu0 %v172
    %219 = vmatprep.subr.bf16.mxu0 0
    %220 = vmatpush1.bf16.xpose.msra.mxu0 %v175
    %221 = vmatprep.subr.bf16.mxu0 0
    %222 = vmatpush1.bf16.xpose.msra.mxu0 %v178
    %223 = vmatprep.subr.bf16.mxu0 0
    %224 = vmatpush1.bf16.xpose.msra.mxu0 %v181
    %225 = vmatprep.subr.bf16.mxu0 0
    %226 = vmatpush1.bf16.xpose.msra.mxu0 %v184
    %227 = vmatprep.subr.bf16.mxu0 0
    %228 = vmatpush1.bf16.xpose.msra.mxu0 %v187
    %229 = vmatprep.subr.bf16.mxu0 0
    %230 = vmatpush1.bf16.xpose.msra.mxu0 %v190
    %231 = vmatprep.subr.bf16.mxu0 0
    %232 = vmatpush1.bf16.xpose.msra.mxu0 %v193
    %233 = vmatprep.subr.bf16.mxu0 0
    %234 = vmatpush1.bf16.xpose.msra.mxu0 %v196
    %235 = vmatprep.subr.bf16.mxu0 0
    %236 = vmatpush1.bf16.xpose.msra.mxu0 %v199
    %237 = vmatprep.subr.bf16.mxu0 0
    %238 = vmatpush1.bf16.xpose.msra.mxu0 %v202
    %239 = vmatprep.subr.bf16.mxu0 0
    %240 = vmatpush1.bf16.xpose.msra.mxu0 %v205
    %241 = vmatprep.subr.bf16.mxu0 0
    %242 = vmatpush1.bf16.xpose.msra.mxu0 %v208
    %243 = vmatprep.subr.bf16.mxu0 0
    %244 = vmatpush1.bf16.xpose.msra.mxu0 %v211
    %245 = vmatprep.mubr.bf16.mxu0 0
    %246 = vmatmul.mubr.bf16.gmra.mrb[0].mxu0 %v154
    %v247 = vpop.f32.mrb[0].mxu0
    %v248 = vadd.f32 %v95, %v247
    %v249 = vpop.f32.mrb[0].mxu0
    %v250 = vadd.f32 %v95, %v249
    %v251 = vpop.f32.mrb[0].mxu0
    %v252 = vadd.f32 %v100, %v251
    %v253 = vpop.f32.mrb[0].mxu0
    %v254 = vadd.f32 %v100, %v253
    %255 = vmatprep.mubr.bf16.mxu0 0
    %256 = vmatmul.mubr.bf16.gmra.mrb[0].mxu0 %v157
    %v257 = vpop.f32.mrb[0].mxu0
    %v258 = vadd.f32 %v105, %v257
    %v259 = vpop.f32.mrb[0].mxu0
    %v260 = vadd.f32 %v105, %v259
    %v261 = vpop.f32.mrb[0].mxu0
    %v262 = vadd.f32 %v110, %v261
    %v263 = vpop.f32.mrb[0].mxu0
    %v264 = vadd.f32 %v110, %v263
    %265 = vmatprep.mubr.bf16.mxu0 0
    %266 = vmatmul.mubr.bf16.gmra.mrb[0].mxu0 %v160
    %v267 = vpop.f32.mrb[0].mxu0
    %v268 = vadd.f32 %v115, %v267
    %v269 = vpop.f32.mrb[0].mxu0
    %v270 = vadd.f32 %v115, %v269
    %v271 = vpop.f32.mrb[0].mxu0
    %v272 = vadd.f32 %v120, %v271
    %v273 = vpop.f32.mrb[0].mxu0
    %v274 = vadd.f32 %v120, %v273
    %275 = vmatprep.mubr.bf16.mxu0 0
    %276 = vmatmul.mubr.bf16.gmra.mrb[0].mxu0 %v163
    %v277 = vpop.f32.mrb[0].mxu0
    %v278 = vadd.f32 %v125, %v277
    %v279 = vpop.f32.mrb[0].mxu0
    %v280 = vadd.f32 %v125, %v279
    %v281 = vpop.f32.mrb[0].mxu0
    %v282 = vadd.f32 %v130, %v281
    %v283 = vpop.f32.mrb[0].mxu0
    %v284 = vadd.f32 %v130, %v283
    %285 = vdwg.mxu0
    %v286 = vmax.f32 %v248, 0.0
    %v287 = vmax.f32 %v250, 0.0
    %v288 = vmax.f32 %v252, 0.0
    %v289 = vmax.f32 %v254, 0.0
    %v290 = vmax.f32 %v258, 0.0
    %v291 = vmax.f32 %v260, 0.0
    %v292 = vmax.f32 %v262, 0.0
    %v293 = vmax.f32 %v264, 0.0
    %v294 = vmax.f32 %v268, 0.0
    %v295 = vmax.f32 %v270, 0.0
    %v296 = vmax.f32 %v272, 0.0
    %v297 = vmax.f32 %v274, 0.0
    %v298 = vmax.f32 %v278, 0.0
    %v299 = vmax.f32 %v280, 0.0
    %v300 = vmax.f32 %v282, 0.0
    %v301 = vmax.f32 %v284, 0.0
    %v302 = vpack.c.bf16 %v288, %v286
    %v303 = vpack.c.bf16 %v289, %v287
    %v304 = vpack.c.bf16 %v292, %v290
    %v305 = vpack.c.bf16 %v293, %v291
    %v306 = vpack.c.bf16 %v296, %v294
    %v307 = vpack.c.bf16 %v297, %v295
    %v308 = vpack.c.bf16 %v300, %v298
    %v309 = vpack.c.bf16 %v301, %v299
    %v310 = vld [vmem:[%s3] sm:$0xf]
    %v311 = vld [vmem:[%s3 + $0x4] sm:$0xf]
    %v312 = vld [vmem:[%s3 + $0x8] sm:$0xf]
    %v313 = vld [vmem:[%s3 + $0xc] sm:$0xf]
    %v314 = vld [vmem:[%s3 + $0x10] sm:$0xf]
    %v315 = vld [vmem:[%s3 + $0x14] sm:$0xf]
    %v316 = vld [vmem:[%s4] sm:$0xff]
    %v317 = vld [vmem:[%s4 + $0x8] sm:$0xff]
    %v318 = vld [vmem:[%s4 + $0x10] sm:$0xff]
    %v319 = vld [vmem:[%s4 + $0x18] sm:$0xff]
    %v320 = vld [vmem:[%s4 + $0x20] sm:$0xff]
    %v321 = vld [vmem:[%s4 + $0x28] sm:$0xff]
    %323 = vset.pattern.permute.xlu0 0
    %324 = vperm.xlu0 %323, %v316
    %v325 = vpop.permute.xlu0 %324
    %328 = vset.pattern.permute.xlu0 0
    %329 = vperm.xlu0 %328, %v317
    %v330 = vpop.permute.xlu0 %329
    %333 = vset.pattern.permute.xlu0 0
    %334 = vperm.xlu0 %333, %v318
    %v335 = vpop.permute.xlu0 %334
    %338 = vset.pattern.permute.xlu0 0
    %339 = vperm.xlu0 %338, %v319
    %v340 = vpop.permute.xlu0 %339
    %343 = vset.pattern.permute.xlu0 0
    %344 = vperm.xlu0 %343, %v320
    %v345 = vpop.permute.xlu0 %344
    %348 = vset.pattern.permute.xlu0 0
    %349 = vperm.xlu0 %348, %v321
    %v350 = vpop.permute.xlu0 %349
    %v358 = vunpack.c.l.b16 %v310
    %v359 = vunpack.c.l.b16 %v311
    %v360 = vunpack.c.l.b16 %v312
    %v361 = vunpack.c.l.b16 %v313
    %v362 = vunpack.c.l.b16 %v314
    %v363 = vunpack.c.l.b16 %v315
    %v364 = vpack.c.b16 %v359, %v358
    %v365 = vpack.c.b16 %v361, %v360
    %v366 = vpack.c.b16 %v363, %v362
    %vm367 = vcmask 523264
    %v369 = vsel %vm367, %v364, 0
    %v372 = vsel %vm367, %v365, 0
    %v375 = vsel %vm367, %v366, 0
    %377 = vmatprep.subr.bf16.mxu0 %v303
    %378 = vmatpush1.bf16.msra.mxu0 %v302
    %379 = vmatprep.subr.bf16.mxu0 %v305
    %380 = vmatpush1.bf16.msra.mxu0 %v304
    %381 = vmatprep.subr.bf16.mxu0 %v307
    %382 = vmatpush1.bf16.msra.mxu0 %v306
    %383 = vmatprep.subr.bf16.mxu0 %v309
    %384 = vmatpush1.bf16.msra.mxu0 %v308
    %385 = vmatprep.subr.bf16.mxu0 0
    %386 = vmatpush1.bf16.msra.mxu0 0
    %387 = vmatprep.subr.bf16.mxu0 0
    %388 = vmatpush1.bf16.msra.mxu0 0
    %389 = vmatprep.subr.bf16.mxu0 0
    %390 = vmatpush1.bf16.msra.mxu0 0
    %391 = vmatprep.subr.bf16.mxu0 0
    %392 = vmatpush1.bf16.msra.mxu0 0
    %393 = vmatprep.subr.bf16.mxu0 0
    %394 = vmatpush1.bf16.msra.mxu0 0
    %395 = vmatprep.subr.bf16.mxu0 0
    %396 = vmatpush1.bf16.msra.mxu0 0
    %397 = vmatprep.subr.bf16.mxu0 0
    %398 = vmatpush1.bf16.msra.mxu0 0
    %399 = vmatprep.subr.bf16.mxu0 0
    %400 = vmatpush1.bf16.msra.mxu0 0
    %401 = vmatprep.subr.bf16.mxu0 0
    %402 = vmatpush1.bf16.msra.mxu0 0
    %403 = vmatprep.subr.bf16.mxu0 0
    %404 = vmatpush1.bf16.msra.mxu0 0
    %405 = vmatprep.subr.bf16.mxu0 0
    %406 = vmatpush1.bf16.msra.mxu0 0
    %407 = vmatprep.subr.bf16.mxu0 0
    %408 = vmatpush1.bf16.msra.mxu0 0
    %409 = vmatprep.mubr.bf16.mxu0 0
    %410 = vmatmul.mubr.bf16.gmra.mrb[0].mxu0 %v369
    %v411 = vpop.f32.mrb[0].mxu0
    %v412 = vadd.f32 %v325, %v411
    %v413 = vpop.f32.mrb[0].mxu0
    %v414 = vadd.f32 %v325, %v413
    %v415 = vpop.f32.mrb[0].mxu0
    %v416 = vadd.f32 %v330, %v415
    %v417 = vpop.f32.mrb[0].mxu0
    %v418 = vadd.f32 %v330, %v417
    %419 = vmatprep.mubr.bf16.mxu0 0
    %420 = vmatmul.mubr.bf16.gmra.mrb[0].mxu0 %v372
    %v421 = vpop.f32.mrb[0].mxu0
    %v422 = vadd.f32 %v335, %v421
    %v423 = vpop.f32.mrb[0].mxu0
    %v424 = vadd.f32 %v335, %v423
    %v425 = vpop.f32.mrb[0].mxu0
    %v426 = vadd.f32 %v340, %v425
    %v427 = vpop.f32.mrb[0].mxu0
    %v428 = vadd.f32 %v340, %v427
    %429 = vmatprep.mubr.bf16.mxu0 0
    %430 = vmatmul.mubr.bf16.gmra.mrb[0].mxu0 %v375
    %v431 = vpop.f32.mrb[0].mxu0
    %v432 = vadd.f32 %v345, %v431
    %v433 = vpop.f32.mrb[0].mxu0
    %v434 = vadd.f32 %v345, %v433
    %v435 = vpop.f32.mrb[0].mxu0
    %v436 = vadd.f32 %v350, %v435
    %v437 = vpop.f32.mrb[0].mxu0
    %v438 = vadd.f32 %v350, %v437
    %439 = vdwg.mxu0
    %v440 = vmax.f32 %v412, 0.0
    %v441 = vmax.f32 %v414, 0.0
    %v442 = vmax.f32 %v416, 0.0
    %v443 = vmax.f32 %v418, 0.0
    %v444 = vmax.f32 %v422, 0.0
    %v445 = vmax.f32 %v424, 0.0
    %v446 = vmax.f32 %v426, 0.0
    %v447 = vmax.f32 %v428, 0.0
    %v448 = vmax.f32 %v432, 0.0
    %v449 = vmax.f32 %v434, 0.0
    %v450 = vmax.f32 %v436, 0.0
    %v451 = vmax.f32 %v438, 0.0
    %v452 = vpack.c.bf16 %v442, %v440
    %v453 = vpack.c.bf16 %v443, %v441
    %v454 = vpack.c.bf16 %v446, %v444
    %v455 = vpack.c.bf16 %v447, %v445
    %v456 = vpack.c.bf16 %v450, %v448
    %v457 = vpack.c.bf16 %v451, %v449
    %v458 = vld [vmem:[%s5] sm:$0xf]
    %v459 = vld [vmem:[%s5 + $0x4] sm:$0xf]
    %v460 = vld [vmem:[%s6] sm:$0xff]
    %v461 = vld [vmem:[%s6 + $0x8] sm:$0xff]
    %463 = vset.pattern.permute.xlu0 0
    %464 = vperm.xlu0 %463, %v460
    %v465 = vpop.permute.xlu0 %464
    %468 = vset.pattern.permute.xlu0 0
    %469 = vperm.xlu0 %468, %v461
    %v470 = vpop.permute.xlu0 %469
    %v474 = vunpack.c.l.b16 %v458
    %v475 = vunpack.c.l.b16 %v459
    %v476 = vpack.c.b16 %v475, %v474
    %vm477 = vcmask 392192
    %v479 = vsel %vm477, %v476, 0
    %481 = vmatprep.subr.bf16.mxu0 %v453
    %482 = vmatpush1.bf16.msra.mxu0 %v452
    %483 = vmatprep.subr.bf16.mxu0 %v455
    %484 = vmatpush1.bf16.msra.mxu0 %v454
    %485 = vmatprep.subr.bf16.mxu0 %v457
    %486 = vmatpush1.bf16.msra.mxu0 %v456
    %487 = vmatprep.subr.bf16.mxu0 0
    %488 = vmatpush1.bf16.msra.mxu0 0
    %489 = vmatprep.subr.bf16.mxu0 0
    %490 = vmatpush1.bf16.msra.mxu0 0
    %491 = vmatprep.subr.bf16.mxu0 0
    %492 = vmatpush1.bf16.msra.mxu0 0
    %493 = vmatprep.subr.bf16.mxu0 0
    %494 = vmatpush1.bf16.msra.mxu0 0
    %495 = vmatprep.subr.bf16.mxu0 0
    %496 = vmatpush1.bf16.msra.mxu0 0
    %497 = vmatprep.subr.bf16.mxu0 0
    %498 = vmatpush1.bf16.msra.mxu0 0
    %499 = vmatprep.subr.bf16.mxu0 0
    %500 = vmatpush1.bf16.msra.mxu0 0
    %501 = vmatprep.subr.bf16.mxu0 0
    %502 = vmatpush1.bf16.msra.mxu0 0
    %503 = vmatprep.subr.bf16.mxu0 0
    %504 = vmatpush1.bf16.msra.mxu0 0
    %505 = vmatprep.subr.bf16.mxu0 0
    %506 = vmatpush1.bf16.msra.mxu0 0
    %507 = vmatprep.subr.bf16.mxu0 0
    %508 = vmatpush1.bf16.msra.mxu0 0
    %509 = vmatprep.subr.bf16.mxu0 0
    %510 = vmatpush1.bf16.msra.mxu0 0
    %511 = vmatprep.subr.bf16.mxu0 0
    %512 = vmatpush1.bf16.msra.mxu0 0
    %513 = vmatprep.mubr.bf16.mxu0 0
    %514 = vmatmul.mubr.bf16.gmra.mrb[0].mxu0 %v479
    %v515 = vpop.f32.mrb[0].mxu0
    %v516 = vadd.f32 %v465, %v515
    %v517 = vpop.f32.mrb[0].mxu0
    %v518 = vadd.f32 %v465, %v517
    %v519 = vpop.f32.mrb[0].mxu0
    %v520 = vadd.f32 %v470, %v519
    %v521 = vpop.f32.mrb[0].mxu0
    %v522 = vadd.f32 %v470, %v521
    %523 = vdwg.mxu0
    %v524 = vmax.f32 %v516, %v520
    %v525 = vrot.slane %v524, 4
    %v526 = vmax.f32 %v524, %v525
    %v527 = vrot.slane %v526, 2
    %v528 = vmax.f32 %v526, %v527
    %v529 = vrot.slane %v528, 1
    %v530 = vmax.f32 %v528, %v529
    %v531 = vmax.f32 %v518, %v522
    %v532 = vrot.slane %v531, 4
    %v533 = vmax.f32 %v531, %v532
    %v534 = vrot.slane %v533, 2
    %v535 = vmax.f32 %v533, %v534
    %v536 = vrot.slane %v535, 1
    %v537 = vmax.f32 %v535, %v536
    %v538 = vsub.f32 %v516, %v530
    %v539 = vsub.f32 %v518, %v537
    %v540 = vsub.f32 %v520, %v530
    %v541 = vsub.f32 %v522, %v537
    %v542 = vmul.f32 %v538, 1.442695
    %v543 = vpow.pop %v542
    %v544 = vmul.f32 %v539, 1.442695
    %v545 = vpow.pop %v544
    %v546 = vmul.f32 %v540, 1.442695
    %v547 = vpow.pop %v546
    %v548 = vmul.f32 %v541, 1.442695
    %v549 = vpow.pop %v548
    %v550 = vadd.f32 %v543, %v547
    %v551 = vrot.slane %v550, 4
    %v552 = vadd.f32 %v550, %v551
    %v553 = vrot.slane %v552, 2
    %v554 = vadd.f32 %v552, %v553
    %v555 = vrot.slane %v554, 1
    %v556 = vadd.f32 %v554, %v555
    %v557 = vadd.f32 %v545, %v549
    %v558 = vrot.slane %v557, 4
    %v559 = vadd.f32 %v557, %v558
    %v560 = vrot.slane %v559, 2
    %v561 = vadd.f32 %v559, %v560
    %v562 = vrot.slane %v561, 1
    %v563 = vadd.f32 %v561, %v562
    %v564 = vrcp.pop %v556
    %v565 = vrcp.pop %v563
    %v566 = vmul.f32 %v543, %v564
    %v567 = vmul.f32 %v545, %v565
    %v568 = vmul.f32 %v547, %v564
    %v569 = vmul.f32 %v549, %v565
    %570 = vst [vmem:[#allocation2] sm:$0xff] %v566
    %571 = vst [vmem:[#allocation2 + $0x8] sm:$0xff] %v567
    %572 = vst [vmem:[#allocation2 + $0x10] sm:$0xff] %v568
    %573 = vst [vmem:[#allocation2 + $0x18] sm:$0xff] %v569
    // Predicated region
    $region30: #{tpu_custom_call.1} parent=1 // pred_check
      _
    $region31: #{tpu_custom_call.1} parent=1 // pred_check_branch
      %575 = sbr.rel (0) target = $region33
    $region32: #{tpu_custom_call.1} parent=1 // pred_region
      %s577 = ssub.s32 512, 512
      %578 = vsyncadd [#allocation3], %s577
      %s579 = sshll.u32 [#allocation2], 4
      %s580 = int_to_ptr.vmem [resolvable:$true] %s579
      %585 = dma.vmem_to_hbm [thread:$0]  %s580, 512, %s7, [#allocation3], 256, 256, 16
    $region33: #{tpu_custom_call.1} parent=1 // pred_fallthru
      _
    // Predicated region
    $region34: #{tpu_custom_call.1} parent=1 // pred_check
      _
    $region35: #{tpu_custom_call.1} parent=1 // pred_check_branch
      %587 = sbr.rel (0) target = $region37
    $region36: #{tpu_custom_call.1} parent=1 // pred_region
      %588 = dma.done [#allocation3], 512
    $region37: #{tpu_custom_call.1} parent=1 // pred_fallthru
      _
    %589 = vsyncpa [#allocation3], 1

</llo_original>
